<compile_context>
chip_gen: v5e
topology: v5e:2x2
jax: 0.10.0
libtpu: 0.0.40
codegen_flags: <defaults>
</compile_context>

<pallas_src>
import functools

import jax
import jax.numpy as jnp
from jax.experimental import pallas as pl
from jax.experimental.pallas import tpu as pltpu

_LANE = 128
_SUBLANE = 8


def _round_up(x, m):
    return (x + m - 1) // m * m


def _ffn_kernel(x_ref, w1_ref, b1_ref, w2_ref, b2_ref, o_ref, acc_ref):
    # x_ref:   (tm, dim_p)   row tile            (grid axis 0)
    # w1_ref:  (dim_p, tff)  streamed W1 block   (grid axis 1)
    # b1_ref:  (1, tff)      streamed b1 block
    # w2_ref:  (tff, dim_p)  streamed W2 block   (grid axis 1)
    # b2_ref:  (1, dim_p)
    # o_ref:   (tm, dim_p)   resident across grid axis 1 (reduction axis)
    # acc_ref: VMEM (tm, dim_p) f32 accumulator
    j = pl.program_id(1)

    @pl.when(j == 0)
    def _():
        acc_ref[...] = jnp.zeros_like(acc_ref)

    h = jnp.dot(x_ref[...], w1_ref[...], preferred_element_type=jnp.float32)
    h = jnp.maximum(h + b1_ref[...], 0.0)  # bias + ReLU in f32
    acc_ref[...] += jnp.dot(h.astype(w2_ref.dtype), w2_ref[...],
                            preferred_element_type=jnp.float32)

    @pl.when(j == pl.num_programs(1) - 1)
    def _():
        o_ref[...] = (acc_ref[...] + b2_ref[...]).astype(o_ref.dtype)


def _choose_tiles(M, dim_p, d_ff_p, itemsize, budget_bytes, max_tff):
    """Pick (tm, tff) so the double-buffered working set fits budget_bytes."""
    tm = min(256 if itemsize >= 4 else 512, _round_up(M, _SUBLANE))

    def vmem_bytes(tm_, tff_):
        two = 2  # pipeline double-buffering
        tiles = (two * tm_ * dim_p          # x tile
                 + two * dim_p * tff_       # W1 tile
                 + two * tff_               # b1 tile
                 + two * tff_ * dim_p       # W2 tile
                 + two * dim_p              # b2 tile
                 + two * tm_ * dim_p)       # out tile
        scratch = tm_ * dim_p * 4           # f32 accumulator
        interm = tm_ * tff_ * 4             # f32 h intermediate
        return tiles * itemsize + scratch + interm

    tff = _LANE
    for cand in (2048, 1024, 512, 256, 128):
        if cand > max_tff:
            continue
        if d_ff_p % cand == 0 and vmem_bytes(tm, cand) <= budget_bytes:
            tff = cand
            break
    while vmem_bytes(tm, tff) > budget_bytes and tm > _SUBLANE:
        tm = max(_SUBLANE, _round_up(tm // 2, _SUBLANE))
    return tm, tff, vmem_bytes(tm, tff)


@functools.partial(
    jax.jit, static_argnames=("compute_dtype", "vmem_budget_bytes", "max_tff"))
def feed_forward_block(x, w1, b1, w2, b2, *, compute_dtype=None,
                       vmem_budget_bytes=40 * 1024 * 1024, max_tff=2048):
    """x: (..., dim); w1: (dim, d_ff); b1: (d_ff,); w2: (d_ff, dim); b2: (dim,)."""
    orig_shape = x.shape
    out_dtype = x.dtype
    dim = orig_shape[-1]
    d_ff = w1.shape[1]
    assert w1.shape == (dim, d_ff) and w2.shape == (d_ff, dim)
    assert b1.shape == (d_ff,) and b2.shape == (dim,)

    if compute_dtype is not None:
        x = x.astype(compute_dtype)
        w1 = w1.astype(compute_dtype)
        w2 = w2.astype(compute_dtype)
    b1 = b1.astype(jnp.float32)
    b2 = b2.astype(jnp.float32)

    x2d = x.reshape(-1, dim)
    M = x2d.shape[0]

    # Lane-dense padding of the feature dims; zero padding is exact.
    dim_p = _round_up(dim, _LANE)
    d_ff_p = _round_up(d_ff, _LANE)

    itemsize = jnp.dtype(x.dtype).itemsize
    tm, tff, ws_bytes = _choose_tiles(M, dim_p, d_ff_p, itemsize,
                                      vmem_budget_bytes, max_tff)
    M_pad = _round_up(M, tm)

    x2d = jnp.pad(x2d, ((0, M_pad - M), (0, dim_p - dim)))
    w1_p = jnp.pad(w1, ((0, dim_p - dim), (0, d_ff_p - d_ff)))
    w2_p = jnp.pad(w2, ((0, d_ff_p - d_ff), (0, dim_p - dim)))
    b1_p = jnp.pad(b1, (0, d_ff_p - d_ff)).reshape(1, d_ff_p)
    b2_p = jnp.pad(b2, (0, dim_p - dim)).reshape(1, dim_p)

    n_row_tiles = M_pad // tm
    grid = (n_row_tiles, d_ff_p // tff)

    flops = 4 * M * dim * d_ff  # two matmuls, 2*M*dim*d_ff each
    io_bytes = (x2d.size * itemsize
                + n_row_tiles * (w1_p.size + w2_p.size) * itemsize
                + n_row_tiles * (b1_p.size + b2_p.size) * 4
                + M_pad * dim_p * jnp.dtype(out_dtype).itemsize)

    out = pl.pallas_call(
        _ffn_kernel,
        out_shape=jax.ShapeDtypeStruct((M_pad, dim_p), out_dtype),
        grid_spec=pltpu.PrefetchScalarGridSpec(
            num_scalar_prefetch=0,
            grid=grid,
            in_specs=[
                pl.BlockSpec((tm, dim_p), lambda i, j: (i, 0)),    # x tile
                pl.BlockSpec((dim_p, tff), lambda i, j: (0, j)),   # W1 block
                pl.BlockSpec((1, tff), lambda i, j: (0, j)),       # b1 block
                pl.BlockSpec((tff, dim_p), lambda i, j: (j, 0)),   # W2 block
                pl.BlockSpec((1, dim_p), lambda i, j: (0, 0)),     # b2
            ],
            out_specs=pl.BlockSpec((tm, dim_p), lambda i, j: (i, 0)),
            scratch_shapes=[pltpu.VMEM((tm, dim_p), jnp.float32)],
        ),
        compiler_params=pltpu.CompilerParams(
            dimension_semantics=("parallel", "arbitrary"),
            vmem_limit_bytes=int(min(max(ws_bytes + (8 << 20), 32 << 20), 64 << 20)),
        ),
        cost_estimate=pl.CostEstimate(
            flops=int(flops), transcendentals=0, bytes_accessed=int(io_bytes)),
    )(x2d, w1_p, b1_p, w2_p, b2_p)

    return out[:M, :dim].reshape(orig_shape)


def init_params(key, dim, d_ff, dtype=jnp.float32):
    """Init matching nn.Linear default (uniform +-1/sqrt(fan_in)).

    Weights are stored transposed relative to PyTorch: (in_features, out_features).
    """
    k1, k2, k3, k4 = jax.random.split(key, 4)
    bound1 = 1.0 / (dim ** 0.5)
    bound2 = 1.0 / (d_ff ** 0.5)
    w1 = jax.random.uniform(k1, (dim, d_ff), dtype, -bound1, bound1)
    b1 = jax.random.uniform(k2, (d_ff,), dtype, -bound1, bound1)
    w2 = jax.random.uniform(k3, (d_ff, dim), dtype, -bound2, bound2)
    b2 = jax.random.uniform(k4, (dim,), dtype, -bound2, bound2)
    return w1, b1, w2, b2


def _ref(x, w1, b1, w2, b2):
    return jnp.maximum(x @ w1 + b1, 0.0) @ w2 + b2


if __name__ == "__main__":
    key = jax.random.PRNGKey(0)

    # --- Test 1: small shapes, single-step reduction grid, f32 exact. -------
    batch, seq, dim, d_ff = 2, 8, 32, 64
    kx, kp, kx2, kp2 = jax.random.split(key, 4)
    x = jax.random.normal(kx, (batch, seq, dim), jnp.float32)
    w1, b1, w2, b2 = init_params(kp, dim, d_ff)

    y = jax.block_until_ready(feed_forward_block(x, w1, b1, w2, b2))
    ref = _ref(x, w1, b1, w2, b2)
    assert y.shape == x.shape
    assert jnp.allclose(y, ref, atol=1e-5, rtol=1e-5)

    # --- Test 2: force multiple d_ff blocks to exercise the accumulator. ----
    dim2, d_ff2 = 32, 256
    x2 = jax.random.normal(kx2, (batch, seq, dim2), jnp.float32)
    w1b, b1b, w2b, b2b = init_params(kp2, dim2, d_ff2)
    y2 = jax.block_until_ready(
        feed_forward_block(x2, w1b, b1b, w2b, b2b, max_tff=128))
    ref2 = _ref(x2, w1b, b1b, w2b, b2b)
    assert y2.shape == x2.shape
    assert jnp.allclose(y2, ref2, atol=1e-5, rtol=1e-5)

    # --- Test 3: bf16 operands, f32 accumulation (loose tolerance). ---------
    y_bf16 = jax.block_until_ready(
        feed_forward_block(x, w1, b1, w2, b2, compute_dtype=jnp.bfloat16))
    assert y_bf16.shape == x.shape
    assert jnp.allclose(y_bf16.astype(jnp.float32), ref, atol=2e-1, rtol=2e-1)

    print("KERNEL_OK")
</pallas_src>

<mosaic_0001>
module attributes {stable_mosaic.version = 11 : i64} {
  func.func @_ffn_kernel(%arg0: i32, %arg1: i32, %arg2: memref<16x128xf32, #tpu.memory_space<vmem>>, %arg3: memref<128x128xf32, #tpu.memory_space<vmem>>, %arg4: memref<1x128xf32, #tpu.memory_space<vmem>>, %arg5: memref<128x128xf32, #tpu.memory_space<vmem>>, %arg6: memref<1x128xf32, #tpu.memory_space<vmem>>, %arg7: memref<16x128xf32, #tpu.memory_space<vmem>>, %arg8: memref<16x128xf32, #tpu.memory_space<vmem>>) attributes {dimension_semantics = [#tpu.dimension_semantics<parallel>, #tpu.dimension_semantics<arbitrary>], iteration_bounds = array<i64: 1, 1>, scalar_prefetch = 0 : i64, scratch_operands = 1 : i64, tpu.core_type = #tpu.core_type<tc>, window_params = [{transform_indices = @transform_0, window_bounds = array<i64: 16, 128>}, {transform_indices = @transform_1, window_bounds = array<i64: 128, 128>}, {transform_indices = @transform_2, window_bounds = array<i64: 1, 128>}, {transform_indices = @transform_3, window_bounds = array<i64: 128, 128>}, {pipeline_mode = #tpu.pipeline_mode<synchronous>, transform_indices = @transform_4, window_bounds = array<i64: 1, 128>}, {transform_indices = @transform_5, window_bounds = array<i64: 16, 128>}]} {
    %c0_i32 = arith.constant 0 : i32
    %0 = arith.cmpi eq, %arg1, %c0_i32 : i32
    %1 = arith.extui %0 : i1 to i32
    %c0_i32_0 = arith.constant 0 : i32
    %2 = arith.cmpi ne, %1, %c0_i32_0 : i32
    scf.if %2 {
      %cst_16 = arith.constant 0.000000e+00 : f32
      %19 = vector.broadcast %cst_16 : f32 to vector<16x128xf32>
      %c0_17 = arith.constant 0 : index
      %c0_18 = arith.constant 0 : index
      %20 = vector.load %arg8[%c0_17, %c0_18] : memref<16x128xf32, #tpu.memory_space<vmem>>, vector<16x128xf32>
      tpu.vector_store %arg8[%c0_17, %c0_18], %19 {strides = array<i32>} : memref<16x128xf32, #tpu.memory_space<vmem>>, vector<16x128xf32>,
    } else {
    }
    %c0 = arith.constant 0 : index
    %c0_1 = arith.constant 0 : index
    %3 = vector.load %arg2[%c0, %c0_1] : memref<16x128xf32, #tpu.memory_space<vmem>>, vector<16x128xf32>
    %c0_2 = arith.constant 0 : index
    %c0_3 = arith.constant 0 : index
    %4 = vector.load %arg3[%c0_2, %c0_3] : memref<128x128xf32, #tpu.memory_space<vmem>>, vector<128x128xf32>
    %cst = arith.constant dense<0.000000e+00> : vector<16x128xf32>
    %5 = tpu.matmul %3, %4, %cst {dimension_numbers = #tpu.dot_dimension_numbers<[1], [0], [0], [1], [0, 0, 1, 1], [], []>} : vector<16x128xf32>, vector<128x128xf32>, vector<16x128xf32> -> vector<16x128xf32>
    %c0_4 = arith.constant 0 : index
    %c0_5 = arith.constant 0 : index
    %6 = vector.load %arg4[%c0_4, %c0_5] : memref<1x128xf32, #tpu.memory_space<vmem>>, vector<1x128xf32>
    %7 = vector.broadcast %6 : vector<1x128xf32> to vector<16x128xf32>
    %8 = arith.addf %5, %7 : vector<16x128xf32>
    %cst_6 = arith.constant 0.000000e+00 : f32
    %9 = vector.broadcast %cst_6 : f32 to vector<16x128xf32>
    %10 = arith.maximumf %8, %9 : vector<16x128xf32>
    %c0_7 = arith.constant 0 : index
    %c0_8 = arith.constant 0 : index
    %11 = vector.load %arg8[%c0_7, %c0_8] : memref<16x128xf32, #tpu.memory_space<vmem>>, vector<16x128xf32>
    %c0_9 = arith.constant 0 : index
    %c0_10 = arith.constant 0 : index
    %12 = vector.load %arg5[%c0_9, %c0_10] : memref<128x128xf32, #tpu.memory_space<vmem>>, vector<128x128xf32>
    %cst_11 = arith.constant dense<0.000000e+00> : vector<16x128xf32>
    %13 = tpu.matmul %10, %12, %cst_11 {dimension_numbers = #tpu.dot_dimension_numbers<[1], [0], [0], [1], [0, 0, 1, 1], [], []>} : vector<16x128xf32>, vector<128x128xf32>, vector<16x128xf32> -> vector<16x128xf32>
    %14 = arith.addf %11, %13 : vector<16x128xf32>
    %c0_12 = arith.constant 0 : index
    %c0_13 = arith.constant 0 : index
    %15 = vector.load %arg8[%c0_12, %c0_13] : memref<16x128xf32, #tpu.memory_space<vmem>>, vector<16x128xf32>
    tpu.vector_store %arg8[%c0_12, %c0_13], %14 {strides = array<i32>} : memref<16x128xf32, #tpu.memory_space<vmem>>, vector<16x128xf32>,
    %c0_i32_14 = arith.constant 0 : i32
    %16 = arith.cmpi eq, %arg1, %c0_i32_14 : i32
    %17 = arith.extui %16 : i1 to i32
    %c0_i32_15 = arith.constant 0 : i32
    %18 = arith.cmpi ne, %17, %c0_i32_15 : i32
    scf.if %18 {
      %c0_16 = arith.constant 0 : index
      %c0_17 = arith.constant 0 : index
      %19 = vector.load %arg8[%c0_16, %c0_17] : memref<16x128xf32, #tpu.memory_space<vmem>>, vector<16x128xf32>
      %c0_18 = arith.constant 0 : index
      %c0_19 = arith.constant 0 : index
      %20 = vector.load %arg6[%c0_18, %c0_19] : memref<1x128xf32, #tpu.memory_space<vmem>>, vector<1x128xf32>
      %21 = vector.broadcast %20 : vector<1x128xf32> to vector<16x128xf32>
      %22 = arith.addf %19, %21 : vector<16x128xf32>
      %c0_20 = arith.constant 0 : index
      %c0_21 = arith.constant 0 : index
      %23 = vector.load %arg7[%c0_20, %c0_21] : memref<16x128xf32, #tpu.memory_space<vmem>>, vector<16x128xf32>
      tpu.vector_store %arg7[%c0_20, %c0_21], %22 {strides = array<i32>} : memref<16x128xf32, #tpu.memory_space<vmem>>, vector<16x128xf32>,
    } else {
    }
    return
  }
  func.func @transform_0(%arg0: i32, %arg1: i32) -> (i32, i32) {
    %c0_i32 = arith.constant 0 : i32
    %c0_i32_0 = arith.constant 0 : i32
    return %arg0, %c0_i32 : i32, i32
  }
  func.func @transform_1(%arg0: i32, %arg1: i32) -> (i32, i32) {
    %c0_i32 = arith.constant 0 : i32
    %c0_i32_0 = arith.constant 0 : i32
    return %c0_i32, %arg1 : i32, i32
  }
  func.func @transform_2(%arg0: i32, %arg1: i32) -> (i32, i32) {
    %c0_i32 = arith.constant 0 : i32
    %c0_i32_0 = arith.constant 0 : i32
    return %c0_i32, %arg1 : i32, i32
  }
  func.func @transform_3(%arg0: i32, %arg1: i32) -> (i32, i32) {
    %c0_i32 = arith.constant 0 : i32
    %c0_i32_0 = arith.constant 0 : i32
    return %arg1, %c0_i32 : i32, i32
  }
  func.func @transform_4(%arg0: i32, %arg1: i32) -> (i32, i32) {
    %c0_i32 = arith.constant 0 : i32
    %c0_i32_0 = arith.constant 0 : i32
    %c0_i32_1 = arith.constant 0 : i32
    return %c0_i32, %c0_i32_0 : i32, i32
  }
  func.func @transform_5(%arg0: i32, %arg1: i32) -> (i32, i32) {
    %c0_i32 = arith.constant 0 : i32
    %c0_i32_0 = arith.constant 0 : i32
    return %arg0, %c0_i32 : i32, i32
  }
}

</mosaic_0001>

<llo_original>
// kernel: feed_forward_block.1
$region0: #{feed_forward_block.1}
  #allocation0 [shape = 'u32[]', space=smem, size = 0x4, offset = 0x4, fixed_abs, tag = 'smem constant byte address 0x4 - core index']
  #allocation1 [shape = 'u32[72,128]{1,0:T(1,128)}', space=vmem, size = 0x9000, scoped, tag = 'internal scratch']
  #allocation2 [shape = 'f32[16,128]{1,0:T(8,128)}', space=vmem, size = 0x2000, scoped, tag = 'scratch operand']
  %s0 = inlined_call_operand.vmem [shape: f32[16,128], index: 0, kind: input, shape index: {}]
  %s1 = inlined_call_operand.vmem [shape: f32[128,128], index: 1, kind: input, shape index: {}]
  %s2 = inlined_call_operand.vmem [shape: f32[1,128], index: 2, kind: input, shape index: {}]
  %s3 = inlined_call_operand.vmem [shape: f32[128,128], index: 3, kind: input, shape index: {}]
  %s4 = inlined_call_operand.vmem [shape: f32[1,128], index: 4, kind: input, shape index: {}]
  %s5 = inlined_call_operand.vmem [shape: f32[16,128], index: 5, kind: output, shape index: {}]
  %s6 = sld [smem:[#allocation0]]
  $region38: #{feed_forward_block.1} parent=0
    _
  %s8 = ssub.s32 1, %s6
  %s9 = scalar_select 0, %s8, %s6
  // Predicated region
  $region2: #{feed_forward_block.1} parent=0 // pred_check
    _
  $region3: #{feed_forward_block.1} parent=0 // pred_check_branch
    %11 = sbr.rel (0) target = $region5
  $region4: #{feed_forward_block.1} parent=0 // pred_region
    _
  $region5: #{feed_forward_block.1} parent=0 // pred_fallthru
    _
  // Predicated region
  $region6: #{feed_forward_block.1} parent=0 // pred_check
    _
  $region7: #{feed_forward_block.1} parent=0 // pred_check_branch
    %13 = sbr.rel (0) target = $region9
  $region8: #{feed_forward_block.1} parent=0 // pred_region
    _
  $region9: #{feed_forward_block.1} parent=0 // pred_fallthru
    _
  // Predicated region
  $region10: #{feed_forward_block.1} parent=0 // pred_check
    _
  $region11: #{feed_forward_block.1} parent=0 // pred_check_branch
    %15 = sbr.rel (0) target = $region13
  $region12: #{feed_forward_block.1} parent=0 // pred_region
    _
  $region13: #{feed_forward_block.1} parent=0 // pred_fallthru
    _
  // Predicated region
  $region14: #{feed_forward_block.1} parent=0 // pred_check
    _
  $region15: #{feed_forward_block.1} parent=0 // pred_check_branch
    %17 = sbr.rel (0) target = $region17
  $region16: #{feed_forward_block.1} parent=0 // pred_region
    _
  $region17: #{feed_forward_block.1} parent=0 // pred_fallthru
    _
  // Predicated region
  $region18: #{feed_forward_block.1} parent=0 // pred_check
    _
  $region19: #{feed_forward_block.1} parent=0 // pred_check_branch
    %19 = sbr.rel (0) target = $region21
  $region20: #{feed_forward_block.1} parent=0 // pred_region
    _
  $region21: #{feed_forward_block.1} parent=0 // pred_fallthru
    _
  %p20 = scmp.eq.s32.totalorder 0, 0
  // Predicated region
  $region22: #{feed_forward_block.1} parent=0 // pred_check
    %p21 = pneg %p20
  $region23: #{feed_forward_block.1} parent=0 // pred_check_branch
    %23 = sbr.rel (%p21) target = $region25
  $region24: #{feed_forward_block.1} parent=0 // pred_region
    %24 = vst [vmem:[#allocation2] sm:$0xff] 0.0
    %25 = vst [vmem:[#allocation2 + $0x8] sm:$0xff] 0.0
  $region25: #{feed_forward_block.1} parent=0 // pred_fallthru
    _
  %v26 = vld [vmem:[%s0] sm:$0xff]
  %v27 = vld [vmem:[%s0 + $0x8] sm:$0xff]
  %v28 = vld [vmem:[%s1] sm:$0xff]
  %v29 = vld [vmem:[%s1 + $0x8] sm:$0xff]
  %v30 = vld [vmem:[%s1 + $0x10] sm:$0xff]
  %v31 = vld [vmem:[%s1 + $0x18] sm:$0xff]
  %v32 = vld [vmem:[%s1 + $0x20] sm:$0xff]
  %v33 = vld [vmem:[%s1 + $0x28] sm:$0xff]
  %v34 = vld [vmem:[%s1 + $0x30] sm:$0xff]
  %v35 = vld [vmem:[%s1 + $0x38] sm:$0xff]
  %v36 = vld [vmem:[%s1 + $0x40] sm:$0xff]
  %v37 = vld [vmem:[%s1 + $0x48] sm:$0xff]
  %v38 = vld [vmem:[%s1 + $0x50] sm:$0xff]
  %v39 = vld [vmem:[%s1 + $0x58] sm:$0xff]
  %v40 = vld [vmem:[%s1 + $0x60] sm:$0xff]
  %v41 = vld [vmem:[%s1 + $0x68] sm:$0xff]
  %v42 = vld [vmem:[%s1 + $0x70] sm:$0xff]
  %v43 = vld [vmem:[%s1 + $0x78] sm:$0xff]
  %v44 = vld [vmem:[%s2] sm:$0x1]
  %v46 = vperm.slane %v44, 0
  %48 = vmatpush.msra.mxu0 %v43
  %49 = vmatpush.msra.mxu0 %v42
  %50 = vmatpush.msra.mxu0 %v41
  %51 = vmatpush.msra.mxu0 %v40
  %52 = vmatpush.msra.mxu0 %v39
  %53 = vmatpush.msra.mxu0 %v38
  %54 = vmatpush.msra.mxu0 %v37
  %55 = vmatpush.msra.mxu0 %v36
  %56 = vmatpush.msra.mxu0 %v35
  %57 = vmatpush.msra.mxu0 %v34
  %58 = vmatpush.msra.mxu0 %v33
  %59 = vmatpush.msra.mxu0 %v32
  %60 = vmatpush.msra.mxu0 %v31
  %61 = vmatpush.msra.mxu0 %v30
  %62 = vmatpush.msra.mxu0 %v29
  %63 = vmatpush.msra.mxu0 %v28
  %64 = vmatmul.f32.gmra.mxu0 %v26
  %v65 = vpop.f32.mrf.mxu0
  %v66 = vadd.f32 %v46, %v65
  %67 = vmatmul.f32.gmra.mxu0 %v27
  %v68 = vpop.f32.mrf.mxu0
  %v69 = vadd.f32 %v46, %v68
  %70 = vdwg.mxu0
  %v71 = vmax.f32 %v66, 0.0
  %v72 = vmax.f32 %v69, 0.0
  %v73 = vld [vmem:[#allocation2] sm:$0xff]
  %v74 = vld [vmem:[#allocation2 + $0x8] sm:$0xff]
  %v75 = vld [vmem:[%s3] sm:$0xff]
  %v76 = vld [vmem:[%s3 + $0x8] sm:$0xff]
  %v77 = vld [vmem:[%s3 + $0x10] sm:$0xff]
  %v78 = vld [vmem:[%s3 + $0x18] sm:$0xff]
  %v79 = vld [vmem:[%s3 + $0x20] sm:$0xff]
  %v80 = vld [vmem:[%s3 + $0x28] sm:$0xff]
  %v81 = vld [vmem:[%s3 + $0x30] sm:$0xff]
  %v82 = vld [vmem:[%s3 + $0x38] sm:$0xff]
  %v83 = vld [vmem:[%s3 + $0x40] sm:$0xff]
  %v84 = vld [vmem:[%s3 + $0x48] sm:$0xff]
  %v85 = vld [vmem:[%s3 + $0x50] sm:$0xff]
  %v86 = vld [vmem:[%s3 + $0x58] sm:$0xff]
  %v87 = vld [vmem:[%s3 + $0x60] sm:$0xff]
  %v88 = vld [vmem:[%s3 + $0x68] sm:$0xff]
  %v89 = vld [vmem:[%s3 + $0x70] sm:$0xff]
  %v90 = vld [vmem:[%s3 + $0x78] sm:$0xff]
  %91 = vmatpush.msra.mxu0 %v90
  %92 = vmatpush.msra.mxu0 %v89
  %93 = vmatpush.msra.mxu0 %v88
  %94 = vmatpush.msra.mxu0 %v87
  %95 = vmatpush.msra.mxu0 %v86
  %96 = vmatpush.msra.mxu0 %v85
  %97 = vmatpush.msra.mxu0 %v84
  %98 = vmatpush.msra.mxu0 %v83
  %99 = vmatpush.msra.mxu0 %v82
  %100 = vmatpush.msra.mxu0 %v81
  %101 = vmatpush.msra.mxu0 %v80
  %102 = vmatpush.msra.mxu0 %v79
  %103 = vmatpush.msra.mxu0 %v78
  %104 = vmatpush.msra.mxu0 %v77
  %105 = vmatpush.msra.mxu0 %v76
  %106 = vmatpush.msra.mxu0 %v75
  %107 = vmatmul.f32.gmra.mxu0 %v71
  %v108 = vpop.f32.mrf.mxu0
  %v109 = vadd.f32 0.0, %v108
  %110 = vmatmul.f32.gmra.mxu0 %v72
  %v111 = vpop.f32.mrf.mxu0
  %v112 = vadd.f32 0.0, %v111
  %113 = vdwg.mxu0
  %v114 = vadd.f32 %v73, %v109
  %v115 = vadd.f32 %v74, %v112
  %116 = vst [vmem:[#allocation2] sm:$0xff] %v114
  %117 = vst [vmem:[#allocation2 + $0x8] sm:$0xff] %v115
  // Predicated region
  $region26: #{feed_forward_block.1} parent=0 // pred_check
    %p118 = pneg %p20
  $region27: #{feed_forward_block.1} parent=0 // pred_check_branch
    %120 = sbr.rel (%p118) target = $region29
  $region28: #{feed_forward_block.1} parent=0 // pred_region
    %v121 = vld [vmem:[#allocation2] sm:$0xff]
    %v122 = vld [vmem:[#allocation2 + $0x8] sm:$0xff]
    %v123 = vld [vmem:[%s4] sm:$0x1]
    %v125 = vperm.slane %v123, 0
    %v127 = vadd.f32 %v121, %v125
    %v128 = vadd.f32 %v122, %v125
    %129 = vst [vmem:[%s5] sm:$0xff] %v127
    %130 = vst [vmem:[%s5 + $0x8] sm:$0xff] %v128
  $region29: #{feed_forward_block.1} parent=0 // pred_fallthru
    _
  // Predicated region
  $region30: #{feed_forward_block.1} parent=0 // pred_check
    _
  $region31: #{feed_forward_block.1} parent=0 // pred_check_branch
    %132 = sbr.rel (0) target = $region33
  $region32: #{feed_forward_block.1} parent=0 // pred_region
    _
  $region33: #{feed_forward_block.1} parent=0 // pred_fallthru
    _
  // Predicated region
  $region34: #{feed_forward_block.1} parent=0 // pred_check
    _
  $region35: #{feed_forward_block.1} parent=0 // pred_check_branch
    %134 = sbr.rel (0) target = $region37
  $region36: #{feed_forward_block.1} parent=0 // pred_region
    _
  $region37: #{feed_forward_block.1} parent=0 // pred_fallthru
    _

</llo_original>
